<compile_context>
chip_gen: v5e
topology: v5e:2x2
jax: 0.10.0
libtpu: 0.0.40
codegen_flags: <defaults>
</compile_context>

<pallas_src>
import functools

import jax
import jax.numpy as jnp
from jax.experimental import pallas as pl
from jax.experimental.pallas import tpu as pltpu

LANE = 128     # vreg lane width (last dim)
SUBLANE = 8    # vreg sublane count (second-to-last dim, f32)


def _round_up(x, m):
    return (x + m - 1) // m * m


def _fused_mlp_kernel(x_ref, *refs, n_layers, dims_pad):
    """Whole MLP in one kernel: Linear -> ReLU -> [Linear -> ReLU]* -> Linear.

    x_ref : (TB, dims_pad[0]) f32 activation tile.
    refs  : n_layers weight refs (K_pad, N_pad) bf16,
            then one packed bias ref (L_pad, N_max_pad) f32,
            then the output ref (TB, dims_pad[-1]) f32.
    """
    w_refs = refs[:n_layers]
    b_all = refs[n_layers][...]           # all biases, one VMEM load
    o_ref = refs[n_layers + 1]

    h = x_ref[...]                        # f32 activations live in vregs
    for li in range(n_layers):
        n_pad = dims_pad[li + 1]
        w = w_refs[li][...]               # (K_pad, n_pad) bf16
        # bf16 x bf16 MXU matmul with f32 accumulation.
        y = jnp.dot(h.astype(jnp.bfloat16), w,
                    preferred_element_type=jnp.float32)
        y = y + b_all[li:li + 1, :n_pad]  # f32 bias, broadcast over rows
        if li != n_layers - 1:
            y = jnp.maximum(y, 0.0)       # ReLU epilogue in f32
        # Dropout after the first Linear+ReLU: identity in eval mode.
        h = y
    o_ref[...] = h.astype(o_ref.dtype)


def mlp_dynamic_forward(x, params):
    """Fused Pallas forward for MLPDynamic (eval mode).

    x      : (B, input_size) float array.
    params : list of (W, b) with W shaped (in_dim, out_dim).
    """
    B, F0 = x.shape
    n_layers = len(params)
    dims = [F0] + [w.shape[1] for (w, _) in params]
    dims_pad = [_round_up(d, LANE) for d in dims]

    # Batch tiling: sublane-dense tiles, "parallel" grid axis (megacore).
    TB = min(_round_up(B, SUBLANE), 128)
    B_pad = _round_up(B, TB)
    grid = (B_pad // TB,)

    f32 = jnp.float32
    x_pad = jnp.zeros((B_pad, dims_pad[0]), f32).at[:B, :F0].set(x.astype(f32))

    # Weights: zero-padded, pre-cast to bf16 (halves HBM/VMEM bytes).
    w_pads = []
    for li, (w, _) in enumerate(params):
        kp, npad = dims_pad[li], dims_pad[li + 1]
        wp = (jnp.zeros((kp, npad), jnp.bfloat16)
              .at[:w.shape[0], :w.shape[1]].set(w.astype(jnp.bfloat16)))
        w_pads.append(wp)

    # All biases packed into one lane/sublane-dense f32 array -> single DMA.
    L_pad = _round_up(n_layers, SUBLANE)
    n_max_pad = max(dims_pad[1:])
    b_all = jnp.zeros((L_pad, n_max_pad), f32)
    for li, (_, b) in enumerate(params):
        b_all = b_all.at[li, :b.shape[0]].set(b.astype(f32))

    in_specs = [pl.BlockSpec((TB, dims_pad[0]), lambda i: (i, 0))]
    for li in range(n_layers):
        kp, npad = dims_pad[li], dims_pad[li + 1]
        # Constant index_map: weights stay resident across batch tiles.
        in_specs.append(pl.BlockSpec((kp, npad), lambda i: (0, 0)))
    in_specs.append(pl.BlockSpec((L_pad, n_max_pad), lambda i: (0, 0)))
    out_spec = pl.BlockSpec((TB, dims_pad[-1]), lambda i: (i, 0))

    flops = sum(2 * B_pad * dims_pad[i] * dims_pad[i + 1]
                for i in range(n_layers))
    bytes_accessed = (x_pad.size * 4
                      + sum(w.size * 2 for w in w_pads)
                      + b_all.size * 4
                      + B_pad * dims_pad[-1] * 4)
    cost = pl.CostEstimate(flops=flops, transcendentals=0,
                           bytes_accessed=bytes_accessed)

    kernel = functools.partial(_fused_mlp_kernel, n_layers=n_layers,
                               dims_pad=tuple(dims_pad))

    out_pad = pl.pallas_call(
        kernel,
        out_shape=jax.ShapeDtypeStruct((B_pad, dims_pad[-1]), f32),
        grid=grid,
        in_specs=in_specs,
        out_specs=out_spec,
        compiler_params=pltpu.CompilerParams(
            dimension_semantics=("parallel",)),
        cost_estimate=cost,
    )(x_pad, *w_pads, b_all)

    # Lane-dense padded output; slice the real result outside the kernel.
    return out_pad[:B, :dims[-1]]


def init_mlp_params(key, input_size, hidden_sizes, output_size=1,
                    dtype=jnp.float32):
    """Deterministic init matching PyTorch layer shapes.

    Returns list of (W, b) with W shaped (in_dim, out_dim) (pre-transposed
    relative to nn.Linear's (out, in) storage).
    """
    dims = [input_size] + list(hidden_sizes) + [output_size]
    params = []
    for in_dim, out_dim in zip(dims[:-1], dims[1:]):
        key, kw, kb = jax.random.split(key, 3)
        bound = 1.0 / jnp.sqrt(jnp.asarray(in_dim, dtype))
        w = jax.random.uniform(kw, (in_dim, out_dim), dtype,
                               minval=-bound, maxval=bound)
        b = jax.random.uniform(kb, (out_dim,), dtype,
                               minval=-bound, maxval=bound)
        params.append((w, b))
    return params


if __name__ == "__main__":
    batch = 2
    input_size = 32
    hidden_sizes = [64, 32, 16]
    output_size = 1

    key = jax.random.PRNGKey(0)
    key, kx = jax.random.split(key)
    x = jax.random.normal(kx, (batch, input_size), jnp.float32)

    params = init_mlp_params(key, input_size, hidden_sizes, output_size)

    # One compiled program: pad -> fused Pallas MLP -> slice.
    fwd = jax.jit(mlp_dynamic_forward)
    out = jax.block_until_ready(fwd(x, params))
    assert out.shape == (batch, output_size), out.shape

    # Pure-JAX reference using the same numerics (bf16 matmul, f32 epilogue).
    ref = x
    for i, (w, b) in enumerate(params):
        ref = jnp.dot(ref.astype(jnp.bfloat16), w.astype(jnp.bfloat16),
                      preferred_element_type=jnp.float32) + b
        if i != len(params) - 1:
            ref = jnp.maximum(ref, 0.0)
    assert jnp.allclose(out, ref, atol=1e-3, rtol=1e-3), (out, ref)

    print("KERNEL_OK")
</pallas_src>

<mosaic_0001>
module attributes {stable_mosaic.version = 11 : i64} {
  func.func @_fused_mlp_kernel(%arg0: i32, %arg1: memref<8x128xf32, #tpu.memory_space<vmem>>, %arg2: memref<128x128xbf16, #tpu.memory_space<vmem>>, %arg3: memref<128x128xbf16, #tpu.memory_space<vmem>>, %arg4: memref<128x128xbf16, #tpu.memory_space<vmem>>, %arg5: memref<128x128xbf16, #tpu.memory_space<vmem>>, %arg6: memref<8x128xf32, #tpu.memory_space<vmem>>, %arg7: memref<8x128xf32, #tpu.memory_space<vmem>>) attributes {dimension_semantics = [#tpu.dimension_semantics<parallel>], iteration_bounds = array<i64: 1>, scalar_prefetch = 0 : i64, scratch_operands = 0 : i64, tpu.core_type = #tpu.core_type<tc>, window_params = [{transform_indices = @transform_0, window_bounds = array<i64: 8, 128>}, {pipeline_mode = #tpu.pipeline_mode<synchronous>, transform_indices = @transform_1, window_bounds = array<i64: 128, 128>}, {pipeline_mode = #tpu.pipeline_mode<synchronous>, transform_indices = @transform_2, window_bounds = array<i64: 128, 128>}, {pipeline_mode = #tpu.pipeline_mode<synchronous>, transform_indices = @transform_3, window_bounds = array<i64: 128, 128>}, {pipeline_mode = #tpu.pipeline_mode<synchronous>, transform_indices = @transform_4, window_bounds = array<i64: 128, 128>}, {pipeline_mode = #tpu.pipeline_mode<synchronous>, transform_indices = @transform_5, window_bounds = array<i64: 8, 128>}, {transform_indices = @transform_6, window_bounds = array<i64: 8, 128>}]} {
    %c0 = arith.constant 0 : index
    %c0_0 = arith.constant 0 : index
    %0 = vector.load %arg6[%c0, %c0_0] : memref<8x128xf32, #tpu.memory_space<vmem>>, vector<8x128xf32>
    %c0_1 = arith.constant 0 : index
    %c0_2 = arith.constant 0 : index
    %1 = vector.load %arg1[%c0_1, %c0_2] : memref<8x128xf32, #tpu.memory_space<vmem>>, vector<8x128xf32>
    %c0_3 = arith.constant 0 : index
    %c0_4 = arith.constant 0 : index
    %2 = vector.load %arg2[%c0_3, %c0_4] : memref<128x128xbf16, #tpu.memory_space<vmem>>, vector<128x128xbf16>
    %3 = arith.truncf %1 : vector<8x128xf32> to vector<8x128xbf16>
    %cst = arith.constant dense<0.000000e+00> : vector<8x128xf32>
    %4 = tpu.matmul %3, %2, %cst {dimension_numbers = #tpu.dot_dimension_numbers<[1], [0], [0], [1], [0, 0, 1, 1], [], []>} : vector<8x128xbf16>, vector<128x128xbf16>, vector<8x128xf32> -> vector<8x128xf32>
    %5 = vector.extract_strided_slice %0 {offsets = [0, 0], sizes = [1, 128], strides = [1, 1]} : vector<8x128xf32> to vector<1x128xf32>
    %6 = vector.broadcast %5 : vector<1x128xf32> to vector<8x128xf32>
    %7 = arith.addf %4, %6 : vector<8x128xf32>
    %cst_5 = arith.constant 0.000000e+00 : f32
    %8 = vector.broadcast %cst_5 : f32 to vector<8x128xf32>
    %9 = arith.maximumf %7, %8 : vector<8x128xf32>
    %c0_6 = arith.constant 0 : index
    %c0_7 = arith.constant 0 : index
    %10 = vector.load %arg3[%c0_6, %c0_7] : memref<128x128xbf16, #tpu.memory_space<vmem>>, vector<128x128xbf16>
    %11 = arith.truncf %9 : vector<8x128xf32> to vector<8x128xbf16>
    %cst_8 = arith.constant dense<0.000000e+00> : vector<8x128xf32>
    %12 = tpu.matmul %11, %10, %cst_8 {dimension_numbers = #tpu.dot_dimension_numbers<[1], [0], [0], [1], [0, 0, 1, 1], [], []>} : vector<8x128xbf16>, vector<128x128xbf16>, vector<8x128xf32> -> vector<8x128xf32>
    %13 = vector.extract_strided_slice %0 {offsets = [1, 0], sizes = [1, 128], strides = [1, 1]} : vector<8x128xf32> to vector<1x128xf32>
    %14 = vector.broadcast %13 : vector<1x128xf32> to vector<8x128xf32>
    %15 = arith.addf %12, %14 : vector<8x128xf32>
    %cst_9 = arith.constant 0.000000e+00 : f32
    %16 = vector.broadcast %cst_9 : f32 to vector<8x128xf32>
    %17 = arith.maximumf %15, %16 : vector<8x128xf32>
    %c0_10 = arith.constant 0 : index
    %c0_11 = arith.constant 0 : index
    %18 = vector.load %arg4[%c0_10, %c0_11] : memref<128x128xbf16, #tpu.memory_space<vmem>>, vector<128x128xbf16>
    %19 = arith.truncf %17 : vector<8x128xf32> to vector<8x128xbf16>
    %cst_12 = arith.constant dense<0.000000e+00> : vector<8x128xf32>
    %20 = tpu.matmul %19, %18, %cst_12 {dimension_numbers = #tpu.dot_dimension_numbers<[1], [0], [0], [1], [0, 0, 1, 1], [], []>} : vector<8x128xbf16>, vector<128x128xbf16>, vector<8x128xf32> -> vector<8x128xf32>
    %21 = vector.extract_strided_slice %0 {offsets = [2, 0], sizes = [1, 128], strides = [1, 1]} : vector<8x128xf32> to vector<1x128xf32>
    %22 = vector.broadcast %21 : vector<1x128xf32> to vector<8x128xf32>
    %23 = arith.addf %20, %22 : vector<8x128xf32>
    %cst_13 = arith.constant 0.000000e+00 : f32
    %24 = vector.broadcast %cst_13 : f32 to vector<8x128xf32>
    %25 = arith.maximumf %23, %24 : vector<8x128xf32>
    %c0_14 = arith.constant 0 : index
    %c0_15 = arith.constant 0 : index
    %26 = vector.load %arg5[%c0_14, %c0_15] : memref<128x128xbf16, #tpu.memory_space<vmem>>, vector<128x128xbf16>
    %27 = arith.truncf %25 : vector<8x128xf32> to vector<8x128xbf16>
    %cst_16 = arith.constant dense<0.000000e+00> : vector<8x128xf32>
    %28 = tpu.matmul %27, %26, %cst_16 {dimension_numbers = #tpu.dot_dimension_numbers<[1], [0], [0], [1], [0, 0, 1, 1], [], []>} : vector<8x128xbf16>, vector<128x128xbf16>, vector<8x128xf32> -> vector<8x128xf32>
    %29 = vector.extract_strided_slice %0 {offsets = [3, 0], sizes = [1, 128], strides = [1, 1]} : vector<8x128xf32> to vector<1x128xf32>
    %30 = vector.broadcast %29 : vector<1x128xf32> to vector<8x128xf32>
    %31 = arith.addf %28, %30 : vector<8x128xf32>
    %c0_17 = arith.constant 0 : index
    %c0_18 = arith.constant 0 : index
    %32 = vector.load %arg7[%c0_17, %c0_18] : memref<8x128xf32, #tpu.memory_space<vmem>>, vector<8x128xf32>
    tpu.vector_store %arg7[%c0_17, %c0_18], %31 {strides = array<i32>} : memref<8x128xf32, #tpu.memory_space<vmem>>, vector<8x128xf32>,
    return
  }
  func.func @transform_0(%arg0: i32) -> (i32, i32) {
    %c0_i32 = arith.constant 0 : i32
    %c0_i32_0 = arith.constant 0 : i32
    return %arg0, %c0_i32 : i32, i32
  }
  func.func @transform_1(%arg0: i32) -> (i32, i32) {
    %c0_i32 = arith.constant 0 : i32
    %c0_i32_0 = arith.constant 0 : i32
    %c0_i32_1 = arith.constant 0 : i32
    return %c0_i32, %c0_i32_0 : i32, i32
  }
  func.func @transform_2(%arg0: i32) -> (i32, i32) {
    %c0_i32 = arith.constant 0 : i32
    %c0_i32_0 = arith.constant 0 : i32
    %c0_i32_1 = arith.constant 0 : i32
    return %c0_i32, %c0_i32_0 : i32, i32
  }
  func.func @transform_3(%arg0: i32) -> (i32, i32) {
    %c0_i32 = arith.constant 0 : i32
    %c0_i32_0 = arith.constant 0 : i32
    %c0_i32_1 = arith.constant 0 : i32
    return %c0_i32, %c0_i32_0 : i32, i32
  }
  func.func @transform_4(%arg0: i32) -> (i32, i32) {
    %c0_i32 = arith.constant 0 : i32
    %c0_i32_0 = arith.constant 0 : i32
    %c0_i32_1 = arith.constant 0 : i32
    return %c0_i32, %c0_i32_0 : i32, i32
  }
  func.func @transform_5(%arg0: i32) -> (i32, i32) {
    %c0_i32 = arith.constant 0 : i32
    %c0_i32_0 = arith.constant 0 : i32
    %c0_i32_1 = arith.constant 0 : i32
    return %c0_i32, %c0_i32_0 : i32, i32
  }
  func.func @transform_6(%arg0: i32) -> (i32, i32) {
    %c0_i32 = arith.constant 0 : i32
    %c0_i32_0 = arith.constant 0 : i32
    return %arg0, %c0_i32 : i32, i32
  }
}

</mosaic_0001>

<llo_original>
// kernel: mlp_dynamic_forward.1
$region0: #{mlp_dynamic_forward.1}
  #allocation0 [shape = 'u32[]', space=smem, size = 0x4, offset = 0x4, fixed_abs, tag = 'smem constant byte address 0x4 - core index']
  #allocation1 [shape = 'u32[72,128]{1,0:T(1,128)}', space=vmem, size = 0x9000, scoped, tag = 'internal scratch']
  %s0 = inlined_call_operand.vmem [shape: f32[8,128], index: 0, kind: input, shape index: {}]
  %s1 = inlined_call_operand.vmem [shape: bf16[128,128], index: 1, kind: input, shape index: {}]
  %s2 = inlined_call_operand.vmem [shape: bf16[128,128], index: 2, kind: input, shape index: {}]
  %s3 = inlined_call_operand.vmem [shape: bf16[128,128], index: 3, kind: input, shape index: {}]
  %s4 = inlined_call_operand.vmem [shape: bf16[128,128], index: 4, kind: input, shape index: {}]
  %s5 = inlined_call_operand.vmem [shape: f32[8,128], index: 5, kind: input, shape index: {}]
  %s6 = inlined_call_operand.vmem [shape: f32[8,128], index: 6, kind: output, shape index: {}]
  %s7 = sld [smem:[#allocation0]]
  $region34: #{mlp_dynamic_forward.1} parent=0
    _
  %s9 = ssub.s32 1, %s7
  %s10 = scalar_select 0, %s9, %s7
  // Predicated region
  $region2: #{mlp_dynamic_forward.1} parent=0 // pred_check
    _
  $region3: #{mlp_dynamic_forward.1} parent=0 // pred_check_branch
    %12 = sbr.rel (0) target = $region5
  $region4: #{mlp_dynamic_forward.1} parent=0 // pred_region
    _
  $region5: #{mlp_dynamic_forward.1} parent=0 // pred_fallthru
    _
  // Predicated region
  $region6: #{mlp_dynamic_forward.1} parent=0 // pred_check
    _
  $region7: #{mlp_dynamic_forward.1} parent=0 // pred_check_branch
    %14 = sbr.rel (0) target = $region9
  $region8: #{mlp_dynamic_forward.1} parent=0 // pred_region
    _
  $region9: #{mlp_dynamic_forward.1} parent=0 // pred_fallthru
    _
  // Predicated region
  $region10: #{mlp_dynamic_forward.1} parent=0 // pred_check
    _
  $region11: #{mlp_dynamic_forward.1} parent=0 // pred_check_branch
    %16 = sbr.rel (0) target = $region13
  $region12: #{mlp_dynamic_forward.1} parent=0 // pred_region
    _
  $region13: #{mlp_dynamic_forward.1} parent=0 // pred_fallthru
    _
  // Predicated region
  $region14: #{mlp_dynamic_forward.1} parent=0 // pred_check
    _
  $region15: #{mlp_dynamic_forward.1} parent=0 // pred_check_branch
    %18 = sbr.rel (0) target = $region17
  $region16: #{mlp_dynamic_forward.1} parent=0 // pred_region
    _
  $region17: #{mlp_dynamic_forward.1} parent=0 // pred_fallthru
    _
  // Predicated region
  $region18: #{mlp_dynamic_forward.1} parent=0 // pred_check
    _
  $region19: #{mlp_dynamic_forward.1} parent=0 // pred_check_branch
    %20 = sbr.rel (0) target = $region21
  $region20: #{mlp_dynamic_forward.1} parent=0 // pred_region
    _
  $region21: #{mlp_dynamic_forward.1} parent=0 // pred_fallthru
    _
  // Predicated region
  $region22: #{mlp_dynamic_forward.1} parent=0 // pred_check
    _
  $region23: #{mlp_dynamic_forward.1} parent=0 // pred_check_branch
    %22 = sbr.rel (0) target = $region25
  $region24: #{mlp_dynamic_forward.1} parent=0 // pred_region
    _
  $region25: #{mlp_dynamic_forward.1} parent=0 // pred_fallthru
    _
  %v23 = vld [vmem:[%s5] sm:$0xff]
  %v24 = vld [vmem:[%s0] sm:$0xff]
  %v25 = vld [vmem:[%s1] sm:$0xf]
  %v26 = vld [vmem:[%s1 + $0x4] sm:$0xf]
  %v27 = vld [vmem:[%s1 + $0x8] sm:$0xf]
  %v28 = vld [vmem:[%s1 + $0xc] sm:$0xf]
  %v29 = vld [vmem:[%s1 + $0x10] sm:$0xf]
  %v30 = vld [vmem:[%s1 + $0x14] sm:$0xf]
  %v31 = vld [vmem:[%s1 + $0x18] sm:$0xf]
  %v32 = vld [vmem:[%s1 + $0x1c] sm:$0xf]
  %v33 = vld [vmem:[%s1 + $0x20] sm:$0xf]
  %v34 = vld [vmem:[%s1 + $0x24] sm:$0xf]
  %v35 = vld [vmem:[%s1 + $0x28] sm:$0xf]
  %v36 = vld [vmem:[%s1 + $0x2c] sm:$0xf]
  %v37 = vld [vmem:[%s1 + $0x30] sm:$0xf]
  %v38 = vld [vmem:[%s1 + $0x34] sm:$0xf]
  %v39 = vld [vmem:[%s1 + $0x38] sm:$0xf]
  %v40 = vld [vmem:[%s1 + $0x3c] sm:$0xf]
  %v41 = vpack.c.bf16 %v24, %v24
  %v42 = vperm.slane %v23, 0
  %v59 = vunpack.c.l.b16 %v25
  %v60 = vunpack.c.l.b16 %v26
  %v61 = vunpack.c.l.b16 %v27
  %v62 = vunpack.c.l.b16 %v28
  %v63 = vunpack.c.l.b16 %v29
  %v64 = vunpack.c.l.b16 %v30
  %v65 = vunpack.c.l.b16 %v31
  %v66 = vunpack.c.l.b16 %v32
  %v67 = vunpack.c.l.b16 %v33
  %v68 = vunpack.c.l.b16 %v34
  %v69 = vunpack.c.l.b16 %v35
  %v70 = vunpack.c.l.b16 %v36
  %v71 = vunpack.c.l.b16 %v37
  %v72 = vunpack.c.l.b16 %v38
  %v73 = vunpack.c.l.b16 %v39
  %v74 = vunpack.c.l.b16 %v40
  %v75 = vpack.c.b16 %v60, %v59
  %v76 = vpack.c.b16 %v62, %v61
  %v77 = vpack.c.b16 %v64, %v63
  %v78 = vpack.c.b16 %v66, %v65
  %v79 = vpack.c.b16 %v68, %v67
  %v80 = vpack.c.b16 %v70, %v69
  %v81 = vpack.c.b16 %v72, %v71
  %v82 = vpack.c.b16 %v74, %v73
  %91 = vmatpush.bf16.msra.mxu0 %v82
  %92 = vmatpush.bf16.msra.mxu0 %v81
  %93 = vmatpush.bf16.msra.mxu0 %v80
  %94 = vmatpush.bf16.msra.mxu0 %v79
  %95 = vmatpush.bf16.msra.mxu0 %v78
  %96 = vmatpush.bf16.msra.mxu0 %v77
  %97 = vmatpush.bf16.msra.mxu0 %v76
  %98 = vmatpush.bf16.msra.mxu0 %v75
  %99 = vmatmul.bf16.gmra.mxu0 %v41
  %v100 = vpop.f32.mrf.mxu0
  %v101 = vadd.f32 %v42, %v100
  %v102 = vpop.f32.mrf.mxu0
  %103 = vdwg.mxu0
  %v104 = vmax.f32 %v101, 0.0
  %v105 = vld [vmem:[%s2] sm:$0xf]
  %v106 = vld [vmem:[%s2 + $0x4] sm:$0xf]
  %v107 = vld [vmem:[%s2 + $0x8] sm:$0xf]
  %v108 = vld [vmem:[%s2 + $0xc] sm:$0xf]
  %v109 = vld [vmem:[%s2 + $0x10] sm:$0xf]
  %v110 = vld [vmem:[%s2 + $0x14] sm:$0xf]
  %v111 = vld [vmem:[%s2 + $0x18] sm:$0xf]
  %v112 = vld [vmem:[%s2 + $0x1c] sm:$0xf]
  %v113 = vld [vmem:[%s2 + $0x20] sm:$0xf]
  %v114 = vld [vmem:[%s2 + $0x24] sm:$0xf]
  %v115 = vld [vmem:[%s2 + $0x28] sm:$0xf]
  %v116 = vld [vmem:[%s2 + $0x2c] sm:$0xf]
  %v117 = vld [vmem:[%s2 + $0x30] sm:$0xf]
  %v118 = vld [vmem:[%s2 + $0x34] sm:$0xf]
  %v119 = vld [vmem:[%s2 + $0x38] sm:$0xf]
  %v120 = vld [vmem:[%s2 + $0x3c] sm:$0xf]
  %v121 = vpack.c.bf16 %v104, %v104
  %v122 = vperm.slane %v23, 1
  %v139 = vunpack.c.l.b16 %v105
  %v140 = vunpack.c.l.b16 %v106
  %v141 = vunpack.c.l.b16 %v107
  %v142 = vunpack.c.l.b16 %v108
  %v143 = vunpack.c.l.b16 %v109
  %v144 = vunpack.c.l.b16 %v110
  %v145 = vunpack.c.l.b16 %v111
  %v146 = vunpack.c.l.b16 %v112
  %v147 = vunpack.c.l.b16 %v113
  %v148 = vunpack.c.l.b16 %v114
  %v149 = vunpack.c.l.b16 %v115
  %v150 = vunpack.c.l.b16 %v116
  %v151 = vunpack.c.l.b16 %v117
  %v152 = vunpack.c.l.b16 %v118
  %v153 = vunpack.c.l.b16 %v119
  %v154 = vunpack.c.l.b16 %v120
  %v155 = vpack.c.b16 %v140, %v139
  %v156 = vpack.c.b16 %v142, %v141
  %v157 = vpack.c.b16 %v144, %v143
  %v158 = vpack.c.b16 %v146, %v145
  %v159 = vpack.c.b16 %v148, %v147
  %v160 = vpack.c.b16 %v150, %v149
  %v161 = vpack.c.b16 %v152, %v151
  %v162 = vpack.c.b16 %v154, %v153
  %171 = vmatpush.bf16.msra.mxu0 %v162
  %172 = vmatpush.bf16.msra.mxu0 %v161
  %173 = vmatpush.bf16.msra.mxu0 %v160
  %174 = vmatpush.bf16.msra.mxu0 %v159
  %175 = vmatpush.bf16.msra.mxu0 %v158
  %176 = vmatpush.bf16.msra.mxu0 %v157
  %177 = vmatpush.bf16.msra.mxu0 %v156
  %178 = vmatpush.bf16.msra.mxu0 %v155
  %179 = vmatmul.bf16.gmra.mxu0 %v121
  %v180 = vpop.f32.mrf.mxu0
  %v181 = vadd.f32 %v122, %v180
  %v182 = vpop.f32.mrf.mxu0
  %183 = vdwg.mxu0
  %v184 = vmax.f32 %v181, 0.0
  %v185 = vld [vmem:[%s3] sm:$0xf]
  %v186 = vld [vmem:[%s3 + $0x4] sm:$0xf]
  %v187 = vld [vmem:[%s3 + $0x8] sm:$0xf]
  %v188 = vld [vmem:[%s3 + $0xc] sm:$0xf]
  %v189 = vld [vmem:[%s3 + $0x10] sm:$0xf]
  %v190 = vld [vmem:[%s3 + $0x14] sm:$0xf]
  %v191 = vld [vmem:[%s3 + $0x18] sm:$0xf]
  %v192 = vld [vmem:[%s3 + $0x1c] sm:$0xf]
  %v193 = vld [vmem:[%s3 + $0x20] sm:$0xf]
  %v194 = vld [vmem:[%s3 + $0x24] sm:$0xf]
  %v195 = vld [vmem:[%s3 + $0x28] sm:$0xf]
  %v196 = vld [vmem:[%s3 + $0x2c] sm:$0xf]
  %v197 = vld [vmem:[%s3 + $0x30] sm:$0xf]
  %v198 = vld [vmem:[%s3 + $0x34] sm:$0xf]
  %v199 = vld [vmem:[%s3 + $0x38] sm:$0xf]
  %v200 = vld [vmem:[%s3 + $0x3c] sm:$0xf]
  %v201 = vpack.c.bf16 %v184, %v184
  %v202 = vperm.slane %v23, 2
  %v219 = vunpack.c.l.b16 %v185
  %v220 = vunpack.c.l.b16 %v186
  %v221 = vunpack.c.l.b16 %v187
  %v222 = vunpack.c.l.b16 %v188
  %v223 = vunpack.c.l.b16 %v189
  %v224 = vunpack.c.l.b16 %v190
  %v225 = vunpack.c.l.b16 %v191
  %v226 = vunpack.c.l.b16 %v192
  %v227 = vunpack.c.l.b16 %v193
  %v228 = vunpack.c.l.b16 %v194
  %v229 = vunpack.c.l.b16 %v195
  %v230 = vunpack.c.l.b16 %v196
  %v231 = vunpack.c.l.b16 %v197
  %v232 = vunpack.c.l.b16 %v198
  %v233 = vunpack.c.l.b16 %v199
  %v234 = vunpack.c.l.b16 %v200
  %v235 = vpack.c.b16 %v220, %v219
  %v236 = vpack.c.b16 %v222, %v221
  %v237 = vpack.c.b16 %v224, %v223
  %v238 = vpack.c.b16 %v226, %v225
  %v239 = vpack.c.b16 %v228, %v227
  %v240 = vpack.c.b16 %v230, %v229
  %v241 = vpack.c.b16 %v232, %v231
  %v242 = vpack.c.b16 %v234, %v233
  %251 = vmatpush.bf16.msra.mxu0 %v242
  %252 = vmatpush.bf16.msra.mxu0 %v241
  %253 = vmatpush.bf16.msra.mxu0 %v240
  %254 = vmatpush.bf16.msra.mxu0 %v239
  %255 = vmatpush.bf16.msra.mxu0 %v238
  %256 = vmatpush.bf16.msra.mxu0 %v237
  %257 = vmatpush.bf16.msra.mxu0 %v236
  %258 = vmatpush.bf16.msra.mxu0 %v235
  %259 = vmatmul.bf16.gmra.mxu0 %v201
  %v260 = vpop.f32.mrf.mxu0
  %v261 = vadd.f32 %v202, %v260
  %v262 = vpop.f32.mrf.mxu0
  %263 = vdwg.mxu0
  %v264 = vmax.f32 %v261, 0.0
  %v265 = vld [vmem:[%s4] sm:$0xf]
  %v266 = vld [vmem:[%s4 + $0x4] sm:$0xf]
  %v267 = vld [vmem:[%s4 + $0x8] sm:$0xf]
  %v268 = vld [vmem:[%s4 + $0xc] sm:$0xf]
  %v269 = vld [vmem:[%s4 + $0x10] sm:$0xf]
  %v270 = vld [vmem:[%s4 + $0x14] sm:$0xf]
  %v271 = vld [vmem:[%s4 + $0x18] sm:$0xf]
  %v272 = vld [vmem:[%s4 + $0x1c] sm:$0xf]
  %v273 = vld [vmem:[%s4 + $0x20] sm:$0xf]
  %v274 = vld [vmem:[%s4 + $0x24] sm:$0xf]
  %v275 = vld [vmem:[%s4 + $0x28] sm:$0xf]
  %v276 = vld [vmem:[%s4 + $0x2c] sm:$0xf]
  %v277 = vld [vmem:[%s4 + $0x30] sm:$0xf]
  %v278 = vld [vmem:[%s4 + $0x34] sm:$0xf]
  %v279 = vld [vmem:[%s4 + $0x38] sm:$0xf]
  %v280 = vld [vmem:[%s4 + $0x3c] sm:$0xf]
  %v281 = vpack.c.bf16 %v264, %v264
  %v282 = vperm.slane %v23, 3
  %v299 = vunpack.c.l.b16 %v265
  %v300 = vunpack.c.l.b16 %v266
  %v301 = vunpack.c.l.b16 %v267
  %v302 = vunpack.c.l.b16 %v268
  %v303 = vunpack.c.l.b16 %v269
  %v304 = vunpack.c.l.b16 %v270
  %v305 = vunpack.c.l.b16 %v271
  %v306 = vunpack.c.l.b16 %v272
  %v307 = vunpack.c.l.b16 %v273
  %v308 = vunpack.c.l.b16 %v274
  %v309 = vunpack.c.l.b16 %v275
  %v310 = vunpack.c.l.b16 %v276
  %v311 = vunpack.c.l.b16 %v277
  %v312 = vunpack.c.l.b16 %v278
  %v313 = vunpack.c.l.b16 %v279
  %v314 = vunpack.c.l.b16 %v280
  %v315 = vpack.c.b16 %v300, %v299
  %v316 = vpack.c.b16 %v302, %v301
  %v317 = vpack.c.b16 %v304, %v303
  %v318 = vpack.c.b16 %v306, %v305
  %v319 = vpack.c.b16 %v308, %v307
  %v320 = vpack.c.b16 %v310, %v309
  %v321 = vpack.c.b16 %v312, %v311
  %v322 = vpack.c.b16 %v314, %v313
  %331 = vmatpush.bf16.msra.mxu0 %v322
  %332 = vmatpush.bf16.msra.mxu0 %v321
  %333 = vmatpush.bf16.msra.mxu0 %v320
  %334 = vmatpush.bf16.msra.mxu0 %v319
  %335 = vmatpush.bf16.msra.mxu0 %v318
  %336 = vmatpush.bf16.msra.mxu0 %v317
  %337 = vmatpush.bf16.msra.mxu0 %v316
  %338 = vmatpush.bf16.msra.mxu0 %v315
  %339 = vmatmul.bf16.gmra.mxu0 %v281
  %v340 = vpop.f32.mrf.mxu0
  %v341 = vadd.f32 %v282, %v340
  %v342 = vpop.f32.mrf.mxu0
  %343 = vdwg.mxu0
  %344 = vst [vmem:[%s6] sm:$0xff] %v341
  // Predicated region
  $region26: #{mlp_dynamic_forward.1} parent=0 // pred_check
    _
  $region27: #{mlp_dynamic_forward.1} parent=0 // pred_check_branch
    %346 = sbr.rel (0) target = $region29
  $region28: #{mlp_dynamic_forward.1} parent=0 // pred_region
    _
  $region29: #{mlp_dynamic_forward.1} parent=0 // pred_fallthru
    _
  // Predicated region
  $region30: #{mlp_dynamic_forward.1} parent=0 // pred_check
    _
  $region31: #{mlp_dynamic_forward.1} parent=0 // pred_check_branch
    %348 = sbr.rel (0) target = $region33
  $region32: #{mlp_dynamic_forward.1} parent=0 // pred_region
    _
  $region33: #{mlp_dynamic_forward.1} parent=0 // pred_fallthru
    _

</llo_original>
